<compile_context>
chip_gen: v5e
topology: v5e:2x2
jax: 0.10.0
libtpu: 0.0.40
codegen_flags: <defaults>
</compile_context>

<pallas_src>
import jax
import jax.numpy as jnp
from jax import lax
from jax.experimental import pallas as pl
from jax.experimental.pallas import tpu as pltpu

INPUT_SIZE = 1
HIDDEN_SIZE = 16
NUM_LAYERS = 2
OUTPUT_SIZE = 1

# Single-pass bf16 MXU operands for the per-step matmul (perf review item). Off by default to
# keep 1e-5 parity with the f32 PyTorch-equivalent reference; enable for max throughput.
USE_BF16_MATMUL = False

# Pre-activation scale folded into the packed weights, per fused gate block [i | f | g | o]:
# sigmoid(z) = 0.5 * (1 + tanh(z/2)), so sigmoid gates get 0.5, the tanh ("g") gate gets 1.0.
GATE_PREACT_SCALE = (0.5, 0.5, 1.0, 0.5)


def lstm_fc_kernel(x_ref, wf_ref, wx_ref, bias_ref, wfc_ref, bfc_ref, out_ref):
    """Fused, software-pipelined 2-layer LSTM recurrence + final linear, all VMEM/vreg-resident.

    Fused gate layout (width 8H = 128): gate blocks [i | f | g | o], each 2H wide,
    and within each block the first H lanes are layer-0, the next H lanes layer-1.
    Carried state is the fused h = [h0 | h1] and c = [c0 | c1] of shape (B, 2H).
    The packed i/f/o columns are pre-scaled by 0.5 so a single tanh + VPU fixup yields
    both the sigmoid and tanh activations.
    """
    B, T = x_ref.shape
    H2, GW = wf_ref.shape          # (2H, 8H) = (32, 128)
    H = H2 // 2

    wf = wf_ref[...]               # (2H, 8H) block-diagonal hidden->gates weights (pre-scaled)
    wx = wx_ref[...]               # (1, 8H)  layer-0 input row (layer-1 slots zero, pre-scaled)
    bias_b = jnp.broadcast_to(bias_ref[...], (B, GW))   # hoisted broadcast of fused biases

    # ---- xb table in vregs: input projection + biases for every step, off the serial chain.
    #      (T+1) x (B, 8H) ~ 9 vregs; no VMEM scratch, no per-step vld inside the recurrence. ----
    x_bt = x_ref[...]              # (B, T)
    xb = [x_bt[:, t:t + 1] * wx + bias_b for t in range(T)]
    # padded drain step: x := 0, only biases -> drives the final layer-1 step; its layer-0
    # result is bounded garbage (tanh/sigmoid-saturated) that wfc's zero rows never emit.
    xb.append(bias_b)

    # ---- gate-selection masks, hoisted out of the loop ----
    lane = lax.broadcasted_iota(jnp.int32, (B, GW), 1)
    tanh_mask = (lane >= 2 * H2) & (lane < 3 * H2)           # the fused "g" gate block
    state_lane = lax.broadcasted_iota(jnp.int32, (B, H2), 1)
    layer0_half = state_lane < H                              # lanes [0, H): layer-0 state

    def gates(g):
        # ONE full-width tanh (EUP) + a cheap VPU fixup for the sigmoid lanes:
        # sigmoid lanes carry z/2 (scale folded into the packed weights), so 0.5*tanh+0.5 == sigmoid(z).
        act = jnp.tanh(g)
        act = jnp.where(tanh_mask, act, act * 0.5 + 0.5)
        return (act[:, 0:H2], act[:, H2:2 * H2],
                act[:, 2 * H2:3 * H2], act[:, 3 * H2:4 * H2])

    # ---- prologue: layer-0 step 0 (h = c = 0 so no matmul needed) ----
    i_g, f_g, g_g, o_g = gates(xb[0])
    c = jnp.where(layer0_half, i_g * g_g, 0.0)   # layer-1 half stays 0 (it starts one step later)
    h = o_g * jnp.tanh(c)                        # layer-1 half is o1 * tanh(0) = 0

    # ---- software-pipelined recurrence: iteration j runs layer0(step j) and layer1(step j-1)
    #      with a single fused (B,2H)x(2H,8H) MXU matmul per iteration. Statically unrolled so
    #      the xb table stays in vregs and the LLO scheduler can overlap steps. ----
    # TODO(synk): for T beyond ~64 move T onto a grid axis (carried h/c in VMEM scratch under
    # pl.when(program_id==0)) instead of full static unroll; on v7x do this at ~half the T
    # threshold (64 MiB VMEM) and add a "parallel" batch grid axis for the 2 TensorCores.
    # TODO(synk): if the bundle dump shows a per-step RHS re-push for wf, switch to
    # pltpu.matmul_push_rhs(wf) once + matmul_acc_lhs/matmul_pop per step.
    mm_dtype = wf.dtype            # bf16 when USE_BF16_MATMUL, else f32; carry stays f32
    for j in range(1, T + 1):
        g = jnp.dot(h.astype(mm_dtype), wf, preferred_element_type=jnp.float32) + xb[j]
        i_g, f_g, g_g, o_g = gates(g)
        c = f_g * c + i_g * g_g
        h = o_g * jnp.tanh(c)

    # TODO(synk): inter-layer dropout (p=0.2) applies only in training mode; omitted (eval semantics).

    # ---- final linear: wfc rows [0, H) are zero, so only h1(T-1) (lanes H:2H) contributes ----
    out_ref[...] = jnp.dot(h, wfc_ref[...], preferred_element_type=jnp.float32) + bfc_ref[...]


def lstm_model_forward(x, packed):
    """x: (B, T, 1) batch_first (PyTorch convention). Returns (B, OUTPUT_SIZE)."""
    B, T, I = x.shape
    assert I == INPUT_SIZE
    x2 = x.reshape(B, T).astype(jnp.float32)   # squeeze I=1: free metadata reshape, no transpose
    vmem = pl.BlockSpec(memory_space=pltpu.MemorySpace.VMEM)
    return pl.pallas_call(
        lstm_fc_kernel,
        out_shape=jax.ShapeDtypeStruct((B, OUTPUT_SIZE), jnp.float32),
        in_specs=[vmem] * 6,
        out_specs=vmem,
    )(x2, packed["wf"], packed["wx"], packed["bias"], packed["wfc"], packed["bfc"])


def init_params(key):
    """Raw PyTorch-shaped parameters, U(-1/sqrt(H), 1/sqrt(H)) like nn.LSTM / nn.Linear."""
    bound = 1.0 / jnp.sqrt(jnp.float32(HIDDEN_SIZE))
    keys = jax.random.split(key, 10)

    def u(k, shape):
        return jax.random.uniform(k, shape, jnp.float32, -bound, bound)

    return {
        "w_ih0": u(keys[0], (4 * HIDDEN_SIZE, INPUT_SIZE)),
        "w_hh0": u(keys[1], (4 * HIDDEN_SIZE, HIDDEN_SIZE)),
        "b_ih0": u(keys[2], (4 * HIDDEN_SIZE,)),
        "b_hh0": u(keys[3], (4 * HIDDEN_SIZE,)),
        "w_ih1": u(keys[4], (4 * HIDDEN_SIZE, HIDDEN_SIZE)),
        "w_hh1": u(keys[5], (4 * HIDDEN_SIZE, HIDDEN_SIZE)),
        "b_ih1": u(keys[6], (4 * HIDDEN_SIZE,)),
        "b_hh1": u(keys[7], (4 * HIDDEN_SIZE,)),
        "w_fc": u(keys[8], (OUTPUT_SIZE, HIDDEN_SIZE)),
        "b_fc": u(keys[9], (OUTPUT_SIZE,)),
    }


def pack_params(p):
    """Pack PyTorch-shaped weights into the fused kernel layout.

    Fused gate order: [i | f | g | o], each block 2H wide = [layer0 (H) | layer1 (H)].
      wf   (2H, 8H): rows 0:H  = h0 -> (whh0 | wih1); rows H:2H = h1 -> (0 | whh1)
      wx   (1, 8H) : layer-0 slots = wih0 row, layer-1 slots = 0
      bias (1, 8H) : layer-0 slots = b_ih0+b_hh0, layer-1 slots = b_ih1+b_hh1
      wfc  (2H, 1) : rows 0:H = 0, rows H:2H = w_fc^T  (so only h1 feeds the output)
    The sigmoid gate blocks (i, f, o) of wf/wx/bias are pre-scaled by 0.5 so the kernel can
    realize sigmoid(z) = 0.5*(1 + tanh(z/2)) with a single tanh per step.
    """
    H = HIDDEN_SIZE
    wih0T = p["w_ih0"].T           # (1, 4H)
    whh0T = p["w_hh0"].T           # (H, 4H)
    wih1T = p["w_ih1"].T           # (H, 4H)
    whh1T = p["w_hh1"].T           # (H, 4H)
    b0 = p["b_ih0"] + p["b_hh0"]   # (4H,)
    b1 = p["b_ih1"] + p["b_hh1"]   # (4H,)

    zeros_hh = jnp.zeros((H, H), jnp.float32)
    zeros_xh = jnp.zeros((1, H), jnp.float32)

    wf_blocks, wx_blocks, b_blocks = [], [], []
    for k in range(4):                                   # PyTorch gate order: i, f, g, o
        s = GATE_PREACT_SCALE[k]
        sl = slice(k * H, (k + 1) * H)
        top = jnp.concatenate([whh0T[:, sl], wih1T[:, sl]], axis=1)   # (H, 2H)
        bot = jnp.concatenate([zeros_hh, whh1T[:, sl]], axis=1)       # (H, 2H)
        wf_blocks.append(s * jnp.concatenate([top, bot], axis=0))     # (2H, 2H)
        wx_blocks.append(s * jnp.concatenate([wih0T[:, sl], zeros_xh], axis=1))
        b_blocks.append(s * jnp.concatenate([b0[sl], b1[sl]])[None, :])

    wf = jnp.concatenate(wf_blocks, axis=1)              # (2H, 8H)
    if USE_BF16_MATMUL:
        wf = wf.astype(jnp.bfloat16)                     # single-pass MXU; ~1e-3 parity

    return {
        "wf": wf,
        "wx": jnp.concatenate(wx_blocks, axis=1),        # (1, 8H)
        "bias": jnp.concatenate(b_blocks, axis=1),       # (1, 8H)
        "wfc": jnp.concatenate(
            [jnp.zeros((H, OUTPUT_SIZE), jnp.float32), p["w_fc"].T], axis=0),  # (2H, OUT)
        "bfc": p["b_fc"][None, :],                        # (1, OUT)
    }


def reference_forward(x, p):
    """Pure-JAX reference with the raw PyTorch-shaped weights (no fusion/pipelining)."""
    B, T, _ = x.shape
    H = HIDDEN_SIZE
    wih0, whh0 = p["w_ih0"].T, p["w_hh0"].T
    wih1, whh1 = p["w_ih1"].T, p["w_hh1"].T
    b0 = p["b_ih0"] + p["b_hh0"]
    b1 = p["b_ih1"] + p["b_hh1"]

    def cell(x_t, h, c, wih, whh, b):
        g = x_t @ wih + h @ whh + b
        i = jax.nn.sigmoid(g[:, 0 * H:1 * H])
        f = jax.nn.sigmoid(g[:, 1 * H:2 * H])
        gg = jnp.tanh(g[:, 2 * H:3 * H])
        o = jax.nn.sigmoid(g[:, 3 * H:4 * H])
        c = f * c + i * gg
        return o * jnp.tanh(c), c

    h0 = c0 = h1 = c1 = jnp.zeros((B, H), jnp.float32)
    for t in range(T):
        h0, c0 = cell(x[:, t, :], h0, c0, wih0, whh0, b0)
        h1, c1 = cell(h0, h1, c1, wih1, whh1, b1)
    return h1 @ p["w_fc"].T + p["b_fc"][None, :]


if __name__ == "__main__":
    key = jax.random.PRNGKey(0)
    k_param, k_x = jax.random.split(key)

    B, T = 2, 8
    params = init_params(k_param)
    packed = pack_params(params)
    x = jax.random.normal(k_x, (B, T, INPUT_SIZE), jnp.float32)

    out = lstm_model_forward(x, packed)
    out = jax.block_until_ready(out)

    ref = reference_forward(x, params)
    assert out.shape == (B, OUTPUT_SIZE), out.shape
    tol = 2e-3 if USE_BF16_MATMUL else 1e-5
    assert jnp.allclose(out, ref, atol=tol, rtol=tol), (out, ref)

    print("KERNEL_OK")
</pallas_src>

<mosaic_0001>
module attributes {stable_mosaic.version = 11 : i64} {
  func.func @lstm_fc_kernel(%arg0: memref<2x8xf32, #tpu.memory_space<vmem>>, %arg1: memref<32x128xf32, #tpu.memory_space<vmem>>, %arg2: memref<1x128xf32, #tpu.memory_space<vmem>>, %arg3: memref<1x128xf32, #tpu.memory_space<vmem>>, %arg4: memref<32x1xf32, #tpu.memory_space<vmem>>, %arg5: memref<1x1xf32, #tpu.memory_space<vmem>>, %arg6: memref<2x1xf32, #tpu.memory_space<vmem>>) attributes {dimension_semantics = [], scalar_prefetch = 0 : i64, scratch_operands = 0 : i64, tpu.core_type = #tpu.core_type<tc>} {
    %c0 = arith.constant 0 : index
    %c0_0 = arith.constant 0 : index
    %0 = vector.load %arg1[%c0, %c0_0] : memref<32x128xf32, #tpu.memory_space<vmem>>, vector<32x128xf32>
    %c0_1 = arith.constant 0 : index
    %c0_2 = arith.constant 0 : index
    %1 = vector.load %arg2[%c0_1, %c0_2] : memref<1x128xf32, #tpu.memory_space<vmem>>, vector<1x128xf32>
    %c0_3 = arith.constant 0 : index
    %c0_4 = arith.constant 0 : index
    %2 = vector.load %arg3[%c0_3, %c0_4] : memref<1x128xf32, #tpu.memory_space<vmem>>, vector<1x128xf32>
    %3 = vector.shape_cast %2 : vector<1x128xf32> to vector<1x128xf32>
    %4 = vector.broadcast %3 : vector<1x128xf32> to vector<2x128xf32>
    %c0_5 = arith.constant 0 : index
    %c0_6 = arith.constant 0 : index
    %5 = vector.load %arg0[%c0_5, %c0_6] : memref<2x8xf32, #tpu.memory_space<vmem>>, vector<2x8xf32>
    %6 = vector.extract_strided_slice %5 {offsets = [0, 0], sizes = [2, 1], strides = [1, 1]} : vector<2x8xf32> to vector<2x1xf32>
    %7 = vector.broadcast %6 : vector<2x1xf32> to vector<2x128xf32>
    %8 = vector.broadcast %1 : vector<1x128xf32> to vector<2x128xf32>
    %9 = arith.mulf %7, %8 : vector<2x128xf32>
    %10 = arith.addf %9, %4 : vector<2x128xf32>
    %11 = vector.extract_strided_slice %5 {offsets = [0, 1], sizes = [2, 1], strides = [1, 1]} : vector<2x8xf32> to vector<2x1xf32>
    %12 = vector.broadcast %11 : vector<2x1xf32> to vector<2x128xf32>
    %13 = vector.broadcast %1 : vector<1x128xf32> to vector<2x128xf32>
    %14 = arith.mulf %12, %13 : vector<2x128xf32>
    %15 = arith.addf %14, %4 : vector<2x128xf32>
    %16 = vector.extract_strided_slice %5 {offsets = [0, 2], sizes = [2, 1], strides = [1, 1]} : vector<2x8xf32> to vector<2x1xf32>
    %17 = vector.broadcast %16 : vector<2x1xf32> to vector<2x128xf32>
    %18 = vector.broadcast %1 : vector<1x128xf32> to vector<2x128xf32>
    %19 = arith.mulf %17, %18 : vector<2x128xf32>
    %20 = arith.addf %19, %4 : vector<2x128xf32>
    %21 = vector.extract_strided_slice %5 {offsets = [0, 3], sizes = [2, 1], strides = [1, 1]} : vector<2x8xf32> to vector<2x1xf32>
    %22 = vector.broadcast %21 : vector<2x1xf32> to vector<2x128xf32>
    %23 = vector.broadcast %1 : vector<1x128xf32> to vector<2x128xf32>
    %24 = arith.mulf %22, %23 : vector<2x128xf32>
    %25 = arith.addf %24, %4 : vector<2x128xf32>
    %26 = vector.extract_strided_slice %5 {offsets = [0, 4], sizes = [2, 1], strides = [1, 1]} : vector<2x8xf32> to vector<2x1xf32>
    %27 = vector.broadcast %26 : vector<2x1xf32> to vector<2x128xf32>
    %28 = vector.broadcast %1 : vector<1x128xf32> to vector<2x128xf32>
    %29 = arith.mulf %27, %28 : vector<2x128xf32>
    %30 = arith.addf %29, %4 : vector<2x128xf32>
    %31 = vector.extract_strided_slice %5 {offsets = [0, 5], sizes = [2, 1], strides = [1, 1]} : vector<2x8xf32> to vector<2x1xf32>
    %32 = vector.broadcast %31 : vector<2x1xf32> to vector<2x128xf32>
    %33 = vector.broadcast %1 : vector<1x128xf32> to vector<2x128xf32>
    %34 = arith.mulf %32, %33 : vector<2x128xf32>
    %35 = arith.addf %34, %4 : vector<2x128xf32>
    %36 = vector.extract_strided_slice %5 {offsets = [0, 6], sizes = [2, 1], strides = [1, 1]} : vector<2x8xf32> to vector<2x1xf32>
    %37 = vector.broadcast %36 : vector<2x1xf32> to vector<2x128xf32>
    %38 = vector.broadcast %1 : vector<1x128xf32> to vector<2x128xf32>
    %39 = arith.mulf %37, %38 : vector<2x128xf32>
    %40 = arith.addf %39, %4 : vector<2x128xf32>
    %41 = vector.extract_strided_slice %5 {offsets = [0, 7], sizes = [2, 1], strides = [1, 1]} : vector<2x8xf32> to vector<2x1xf32>
    %42 = vector.broadcast %41 : vector<2x1xf32> to vector<2x128xf32>
    %43 = vector.broadcast %1 : vector<1x128xf32> to vector<2x128xf32>
    %44 = arith.mulf %42, %43 : vector<2x128xf32>
    %45 = arith.addf %44, %4 : vector<2x128xf32>
    %46 = tpu.iota {dimensions = array<i32: 1>} : vector<2x128xi32>
    %c64_i32 = arith.constant 64 : i32
    %47 = vector.broadcast %c64_i32 : i32 to vector<2x128xi32>
    %48 = arith.cmpi sge, %46, %47 : vector<2x128xi32>
    %c96_i32 = arith.constant 96 : i32
    %49 = vector.broadcast %c96_i32 : i32 to vector<2x128xi32>
    %50 = arith.cmpi slt, %46, %49 : vector<2x128xi32>
    %51 = arith.andi %48, %50 : vector<2x128xi1>
    %52 = tpu.iota {dimensions = array<i32: 1>} : vector<2x32xi32>
    %c16_i32 = arith.constant 16 : i32
    %53 = vector.broadcast %c16_i32 : i32 to vector<2x32xi32>
    %54 = arith.cmpi slt, %52, %53 : vector<2x32xi32>
    %55 = math.tanh %10 : vector<2x128xf32>
    %cst = arith.constant 5.000000e-01 : f32
    %56 = vector.broadcast %cst : f32 to vector<2x128xf32>
    %57 = arith.mulf %55, %56 : vector<2x128xf32>
    %cst_7 = arith.constant 5.000000e-01 : f32
    %58 = vector.broadcast %cst_7 : f32 to vector<2x128xf32>
    %59 = arith.addf %57, %58 : vector<2x128xf32>
    %60 = arith.select %51, %55, %59 : vector<2x128xi1>, vector<2x128xf32>
    %61 = vector.extract_strided_slice %60 {offsets = [0, 0], sizes = [2, 32], strides = [1, 1]} : vector<2x128xf32> to vector<2x32xf32>
    %62 = vector.extract_strided_slice %60 {offsets = [0, 64], sizes = [2, 32], strides = [1, 1]} : vector<2x128xf32> to vector<2x32xf32>
    %63 = vector.extract_strided_slice %60 {offsets = [0, 96], sizes = [2, 32], strides = [1, 1]} : vector<2x128xf32> to vector<2x32xf32>
    %64 = arith.mulf %61, %62 : vector<2x32xf32>
    %cst_8 = arith.constant 0.000000e+00 : f32
    %65 = vector.broadcast %cst_8 : f32 to vector<2x32xf32>
    %66 = arith.select %54, %64, %65 : vector<2x32xi1>, vector<2x32xf32>
    %67 = math.tanh %66 : vector<2x32xf32>
    %68 = arith.mulf %63, %67 : vector<2x32xf32>
    %cst_9 = arith.constant dense<0.000000e+00> : vector<2x128xf32>
    %69 = tpu.matmul %68, %0, %cst_9 {dimension_numbers = #tpu.dot_dimension_numbers<[1], [0], [0], [1], [0, 0, 1, 1], [], []>} : vector<2x32xf32>, vector<32x128xf32>, vector<2x128xf32> -> vector<2x128xf32>
    %70 = arith.addf %69, %15 : vector<2x128xf32>
    %71 = math.tanh %70 : vector<2x128xf32>
    %cst_10 = arith.constant 5.000000e-01 : f32
    %72 = vector.broadcast %cst_10 : f32 to vector<2x128xf32>
    %73 = arith.mulf %71, %72 : vector<2x128xf32>
    %cst_11 = arith.constant 5.000000e-01 : f32
    %74 = vector.broadcast %cst_11 : f32 to vector<2x128xf32>
    %75 = arith.addf %73, %74 : vector<2x128xf32>
    %76 = arith.select %51, %71, %75 : vector<2x128xi1>, vector<2x128xf32>
    %77 = vector.extract_strided_slice %76 {offsets = [0, 0], sizes = [2, 32], strides = [1, 1]} : vector<2x128xf32> to vector<2x32xf32>
    %78 = vector.extract_strided_slice %76 {offsets = [0, 32], sizes = [2, 32], strides = [1, 1]} : vector<2x128xf32> to vector<2x32xf32>
    %79 = vector.extract_strided_slice %76 {offsets = [0, 64], sizes = [2, 32], strides = [1, 1]} : vector<2x128xf32> to vector<2x32xf32>
    %80 = vector.extract_strided_slice %76 {offsets = [0, 96], sizes = [2, 32], strides = [1, 1]} : vector<2x128xf32> to vector<2x32xf32>
    %81 = arith.mulf %78, %66 : vector<2x32xf32>
    %82 = arith.mulf %77, %79 : vector<2x32xf32>
    %83 = arith.addf %81, %82 : vector<2x32xf32>
    %84 = math.tanh %83 : vector<2x32xf32>
    %85 = arith.mulf %80, %84 : vector<2x32xf32>
    %cst_12 = arith.constant dense<0.000000e+00> : vector<2x128xf32>
    %86 = tpu.matmul %85, %0, %cst_12 {dimension_numbers = #tpu.dot_dimension_numbers<[1], [0], [0], [1], [0, 0, 1, 1], [], []>} : vector<2x32xf32>, vector<32x128xf32>, vector<2x128xf32> -> vector<2x128xf32>
    %87 = arith.addf %86, %20 : vector<2x128xf32>
    %88 = math.tanh %87 : vector<2x128xf32>
    %cst_13 = arith.constant 5.000000e-01 : f32
    %89 = vector.broadcast %cst_13 : f32 to vector<2x128xf32>
    %90 = arith.mulf %88, %89 : vector<2x128xf32>
    %cst_14 = arith.constant 5.000000e-01 : f32
    %91 = vector.broadcast %cst_14 : f32 to vector<2x128xf32>
    %92 = arith.addf %90, %91 : vector<2x128xf32>
    %93 = arith.select %51, %88, %92 : vector<2x128xi1>, vector<2x128xf32>
    %94 = vector.extract_strided_slice %93 {offsets = [0, 0], sizes = [2, 32], strides = [1, 1]} : vector<2x128xf32> to vector<2x32xf32>
    %95 = vector.extract_strided_slice %93 {offsets = [0, 32], sizes = [2, 32], strides = [1, 1]} : vector<2x128xf32> to vector<2x32xf32>
    %96 = vector.extract_strided_slice %93 {offsets = [0, 64], sizes = [2, 32], strides = [1, 1]} : vector<2x128xf32> to vector<2x32xf32>
    %97 = vector.extract_strided_slice %93 {offsets = [0, 96], sizes = [2, 32], strides = [1, 1]} : vector<2x128xf32> to vector<2x32xf32>
    %98 = arith.mulf %95, %83 : vector<2x32xf32>
    %99 = arith.mulf %94, %96 : vector<2x32xf32>
    %100 = arith.addf %98, %99 : vector<2x32xf32>
    %101 = math.tanh %100 : vector<2x32xf32>
    %102 = arith.mulf %97, %101 : vector<2x32xf32>
    %cst_15 = arith.constant dense<0.000000e+00> : vector<2x128xf32>
    %103 = tpu.matmul %102, %0, %cst_15 {dimension_numbers = #tpu.dot_dimension_numbers<[1], [0], [0], [1], [0, 0, 1, 1], [], []>} : vector<2x32xf32>, vector<32x128xf32>, vector<2x128xf32> -> vector<2x128xf32>
    %104 = arith.addf %103, %25 : vector<2x128xf32>
    %105 = math.tanh %104 : vector<2x128xf32>
    %cst_16 = arith.constant 5.000000e-01 : f32
    %106 = vector.broadcast %cst_16 : f32 to vector<2x128xf32>
    %107 = arith.mulf %105, %106 : vector<2x128xf32>
    %cst_17 = arith.constant 5.000000e-01 : f32
    %108 = vector.broadcast %cst_17 : f32 to vector<2x128xf32>
    %109 = arith.addf %107, %108 : vector<2x128xf32>
    %110 = arith.select %51, %105, %109 : vector<2x128xi1>, vector<2x128xf32>
    %111 = vector.extract_strided_slice %110 {offsets = [0, 0], sizes = [2, 32], strides = [1, 1]} : vector<2x128xf32> to vector<2x32xf32>
    %112 = vector.extract_strided_slice %110 {offsets = [0, 32], sizes = [2, 32], strides = [1, 1]} : vector<2x128xf32> to vector<2x32xf32>
    %113 = vector.extract_strided_slice %110 {offsets = [0, 64], sizes = [2, 32], strides = [1, 1]} : vector<2x128xf32> to vector<2x32xf32>
    %114 = vector.extract_strided_slice %110 {offsets = [0, 96], sizes = [2, 32], strides = [1, 1]} : vector<2x128xf32> to vector<2x32xf32>
    %115 = arith.mulf %112, %100 : vector<2x32xf32>
    %116 = arith.mulf %111, %113 : vector<2x32xf32>
    %117 = arith.addf %115, %116 : vector<2x32xf32>
    %118 = math.tanh %117 : vector<2x32xf32>
    %119 = arith.mulf %114, %118 : vector<2x32xf32>
    %cst_18 = arith.constant dense<0.000000e+00> : vector<2x128xf32>
    %120 = tpu.matmul %119, %0, %cst_18 {dimension_numbers = #tpu.dot_dimension_numbers<[1], [0], [0], [1], [0, 0, 1, 1], [], []>} : vector<2x32xf32>, vector<32x128xf32>, vector<2x128xf32> -> vector<2x128xf32>
    %121 = arith.addf %120, %30 : vector<2x128xf32>
    %122 = math.tanh %121 : vector<2x128xf32>
    %cst_19 = arith.constant 5.000000e-01 : f32
    %123 = vector.broadcast %cst_19 : f32 to vector<2x128xf32>
    %124 = arith.mulf %122, %123 : vector<2x128xf32>
    %cst_20 = arith.constant 5.000000e-01 : f32
    %125 = vector.broadcast %cst_20 : f32 to vector<2x128xf32>
    %126 = arith.addf %124, %125 : vector<2x128xf32>
    %127 = arith.select %51, %122, %126 : vector<2x128xi1>, vector<2x128xf32>
    %128 = vector.extract_strided_slice %127 {offsets = [0, 0], sizes = [2, 32], strides = [1, 1]} : vector<2x128xf32> to vector<2x32xf32>
    %129 = vector.extract_strided_slice %127 {offsets = [0, 32], sizes = [2, 32], strides = [1, 1]} : vector<2x128xf32> to vector<2x32xf32>
    %130 = vector.extract_strided_slice %127 {offsets = [0, 64], sizes = [2, 32], strides = [1, 1]} : vector<2x128xf32> to vector<2x32xf32>
    %131 = vector.extract_strided_slice %127 {offsets = [0, 96], sizes = [2, 32], strides = [1, 1]} : vector<2x128xf32> to vector<2x32xf32>
    %132 = arith.mulf %129, %117 : vector<2x32xf32>
    %133 = arith.mulf %128, %130 : vector<2x32xf32>
    %134 = arith.addf %132, %133 : vector<2x32xf32>
    %135 = math.tanh %134 : vector<2x32xf32>
    %136 = arith.mulf %131, %135 : vector<2x32xf32>
    %cst_21 = arith.constant dense<0.000000e+00> : vector<2x128xf32>
    %137 = tpu.matmul %136, %0, %cst_21 {dimension_numbers = #tpu.dot_dimension_numbers<[1], [0], [0], [1], [0, 0, 1, 1], [], []>} : vector<2x32xf32>, vector<32x128xf32>, vector<2x128xf32> -> vector<2x128xf32>
    %138 = arith.addf %137, %35 : vector<2x128xf32>
    %139 = math.tanh %138 : vector<2x128xf32>
    %cst_22 = arith.constant 5.000000e-01 : f32
    %140 = vector.broadcast %cst_22 : f32 to vector<2x128xf32>
    %141 = arith.mulf %139, %140 : vector<2x128xf32>
    %cst_23 = arith.constant 5.000000e-01 : f32
    %142 = vector.broadcast %cst_23 : f32 to vector<2x128xf32>
    %143 = arith.addf %141, %142 : vector<2x128xf32>
    %144 = arith.select %51, %139, %143 : vector<2x128xi1>, vector<2x128xf32>
    %145 = vector.extract_strided_slice %144 {offsets = [0, 0], sizes = [2, 32], strides = [1, 1]} : vector<2x128xf32> to vector<2x32xf32>
    %146 = vector.extract_strided_slice %144 {offsets = [0, 32], sizes = [2, 32], strides = [1, 1]} : vector<2x128xf32> to vector<2x32xf32>
    %147 = vector.extract_strided_slice %144 {offsets = [0, 64], sizes = [2, 32], strides = [1, 1]} : vector<2x128xf32> to vector<2x32xf32>
    %148 = vector.extract_strided_slice %144 {offsets = [0, 96], sizes = [2, 32], strides = [1, 1]} : vector<2x128xf32> to vector<2x32xf32>
    %149 = arith.mulf %146, %134 : vector<2x32xf32>
    %150 = arith.mulf %145, %147 : vector<2x32xf32>
    %151 = arith.addf %149, %150 : vector<2x32xf32>
    %152 = math.tanh %151 : vector<2x32xf32>
    %153 = arith.mulf %148, %152 : vector<2x32xf32>
    %cst_24 = arith.constant dense<0.000000e+00> : vector<2x128xf32>
    %154 = tpu.matmul %153, %0, %cst_24 {dimension_numbers = #tpu.dot_dimension_numbers<[1], [0], [0], [1], [0, 0, 1, 1], [], []>} : vector<2x32xf32>, vector<32x128xf32>, vector<2x128xf32> -> vector<2x128xf32>
    %155 = arith.addf %154, %40 : vector<2x128xf32>
    %156 = math.tanh %155 : vector<2x128xf32>
    %cst_25 = arith.constant 5.000000e-01 : f32
    %157 = vector.broadcast %cst_25 : f32 to vector<2x128xf32>
    %158 = arith.mulf %156, %157 : vector<2x128xf32>
    %cst_26 = arith.constant 5.000000e-01 : f32
    %159 = vector.broadcast %cst_26 : f32 to vector<2x128xf32>
    %160 = arith.addf %158, %159 : vector<2x128xf32>
    %161 = arith.select %51, %156, %160 : vector<2x128xi1>, vector<2x128xf32>
    %162 = vector.extract_strided_slice %161 {offsets = [0, 0], sizes = [2, 32], strides = [1, 1]} : vector<2x128xf32> to vector<2x32xf32>
    %163 = vector.extract_strided_slice %161 {offsets = [0, 32], sizes = [2, 32], strides = [1, 1]} : vector<2x128xf32> to vector<2x32xf32>
    %164 = vector.extract_strided_slice %161 {offsets = [0, 64], sizes = [2, 32], strides = [1, 1]} : vector<2x128xf32> to vector<2x32xf32>
    %165 = vector.extract_strided_slice %161 {offsets = [0, 96], sizes = [2, 32], strides = [1, 1]} : vector<2x128xf32> to vector<2x32xf32>
    %166 = arith.mulf %163, %151 : vector<2x32xf32>
    %167 = arith.mulf %162, %164 : vector<2x32xf32>
    %168 = arith.addf %166, %167 : vector<2x32xf32>
    %169 = math.tanh %168 : vector<2x32xf32>
    %170 = arith.mulf %165, %169 : vector<2x32xf32>
    %cst_27 = arith.constant dense<0.000000e+00> : vector<2x128xf32>
    %171 = tpu.matmul %170, %0, %cst_27 {dimension_numbers = #tpu.dot_dimension_numbers<[1], [0], [0], [1], [0, 0, 1, 1], [], []>} : vector<2x32xf32>, vector<32x128xf32>, vector<2x128xf32> -> vector<2x128xf32>
    %172 = arith.addf %171, %45 : vector<2x128xf32>
    %173 = math.tanh %172 : vector<2x128xf32>
    %cst_28 = arith.constant 5.000000e-01 : f32
    %174 = vector.broadcast %cst_28 : f32 to vector<2x128xf32>
    %175 = arith.mulf %173, %174 : vector<2x128xf32>
    %cst_29 = arith.constant 5.000000e-01 : f32
    %176 = vector.broadcast %cst_29 : f32 to vector<2x128xf32>
    %177 = arith.addf %175, %176 : vector<2x128xf32>
    %178 = arith.select %51, %173, %177 : vector<2x128xi1>, vector<2x128xf32>
    %179 = vector.extract_strided_slice %178 {offsets = [0, 0], sizes = [2, 32], strides = [1, 1]} : vector<2x128xf32> to vector<2x32xf32>
    %180 = vector.extract_strided_slice %178 {offsets = [0, 32], sizes = [2, 32], strides = [1, 1]} : vector<2x128xf32> to vector<2x32xf32>
    %181 = vector.extract_strided_slice %178 {offsets = [0, 64], sizes = [2, 32], strides = [1, 1]} : vector<2x128xf32> to vector<2x32xf32>
    %182 = vector.extract_strided_slice %178 {offsets = [0, 96], sizes = [2, 32], strides = [1, 1]} : vector<2x128xf32> to vector<2x32xf32>
    %183 = arith.mulf %180, %168 : vector<2x32xf32>
    %184 = arith.mulf %179, %181 : vector<2x32xf32>
    %185 = arith.addf %183, %184 : vector<2x32xf32>
    %186 = math.tanh %185 : vector<2x32xf32>
    %187 = arith.mulf %182, %186 : vector<2x32xf32>
    %cst_30 = arith.constant dense<0.000000e+00> : vector<2x128xf32>
    %188 = tpu.matmul %187, %0, %cst_30 {dimension_numbers = #tpu.dot_dimension_numbers<[1], [0], [0], [1], [0, 0, 1, 1], [], []>} : vector<2x32xf32>, vector<32x128xf32>, vector<2x128xf32> -> vector<2x128xf32>
    %189 = arith.addf %188, %4 : vector<2x128xf32>
    %190 = math.tanh %189 : vector<2x128xf32>
    %cst_31 = arith.constant 5.000000e-01 : f32
    %191 = vector.broadcast %cst_31 : f32 to vector<2x128xf32>
    %192 = arith.mulf %190, %191 : vector<2x128xf32>
    %cst_32 = arith.constant 5.000000e-01 : f32
    %193 = vector.broadcast %cst_32 : f32 to vector<2x128xf32>
    %194 = arith.addf %192, %193 : vector<2x128xf32>
    %195 = arith.select %51, %190, %194 : vector<2x128xi1>, vector<2x128xf32>
    %196 = vector.extract_strided_slice %195 {offsets = [0, 0], sizes = [2, 32], strides = [1, 1]} : vector<2x128xf32> to vector<2x32xf32>
    %197 = vector.extract_strided_slice %195 {offsets = [0, 32], sizes = [2, 32], strides = [1, 1]} : vector<2x128xf32> to vector<2x32xf32>
    %198 = vector.extract_strided_slice %195 {offsets = [0, 64], sizes = [2, 32], strides = [1, 1]} : vector<2x128xf32> to vector<2x32xf32>
    %199 = vector.extract_strided_slice %195 {offsets = [0, 96], sizes = [2, 32], strides = [1, 1]} : vector<2x128xf32> to vector<2x32xf32>
    %200 = arith.mulf %197, %185 : vector<2x32xf32>
    %201 = arith.mulf %196, %198 : vector<2x32xf32>
    %202 = arith.addf %200, %201 : vector<2x32xf32>
    %203 = math.tanh %202 : vector<2x32xf32>
    %204 = arith.mulf %199, %203 : vector<2x32xf32>
    %c0_33 = arith.constant 0 : index
    %c0_34 = arith.constant 0 : index
    %205 = vector.load %arg4[%c0_33, %c0_34] : memref<32x1xf32, #tpu.memory_space<vmem>>, vector<32x1xf32>
    %cst_35 = arith.constant dense<0.000000e+00> : vector<2x1xf32>
    %206 = tpu.matmul %204, %205, %cst_35 {dimension_numbers = #tpu.dot_dimension_numbers<[1], [0], [0], [1], [0, 0, 1, 1], [], []>} : vector<2x32xf32>, vector<32x1xf32>, vector<2x1xf32> -> vector<2x1xf32>
    %c0_36 = arith.constant 0 : index
    %c0_37 = arith.constant 0 : index
    %207 = vector.load %arg5[%c0_36, %c0_37] : memref<1x1xf32, #tpu.memory_space<vmem>>, vector<1x1xf32>
    %208 = vector.broadcast %207 : vector<1x1xf32> to vector<2x1xf32>
    %209 = arith.addf %206, %208 : vector<2x1xf32>
    %c0_38 = arith.constant 0 : index
    %c0_39 = arith.constant 0 : index
    %210 = vector.load %arg6[%c0_38, %c0_39] : memref<2x1xf32, #tpu.memory_space<vmem>>, vector<2x1xf32>
    tpu.vector_store %arg6[%c0_38, %c0_39], %209 {strides = array<i32>} : memref<2x1xf32, #tpu.memory_space<vmem>>, vector<2x1xf32>,
    return
  }
}

</mosaic_0001>

<llo_original>
// kernel: tpu_custom_call.1
$region0: #{tpu_custom_call.1}
  #allocation0 [shape = 'u32[]', space=smem, size = 0x4, offset = 0x4, fixed_abs, tag = 'smem constant byte address 0x4 - core index']
  #allocation1 [shape = 'u32[72,128]{1,0:T(1,128)}', space=vmem, size = 0x9000, scoped, tag = 'internal scratch']
  #allocation2 [shape = 'f32[1,1]{1,0:T(1,128)S(1)}', space=vmem, size = 0x200, scoped, tag = 'scoped memory for tpu_custom_call.1']
  %s0 = inlined_call_operand.vmem [shape: f32[2,8], index: 0, kind: input, shape index: {}]
  %s1 = inlined_call_operand.vmem [shape: f32[32,128], index: 1, kind: input, shape index: {}]
  %s2 = inlined_call_operand.vmem [shape: f32[1,128], index: 2, kind: input, shape index: {}]
  %s3 = inlined_call_operand.vmem [shape: f32[1,128], index: 3, kind: input, shape index: {}]
  %s4 = inlined_call_operand.vmem [shape: f32[32,1], index: 4, kind: input, shape index: {}]
  %s5 = inlined_call_operand.<no memory space> [shape: f32[1,1], index: 5, kind: input, shape index: {}]
  %s6 = inlined_call_operand.vmem [shape: f32[2,1], index: 6, kind: output, shape index: {}]
  %s7 = sld [smem:[#allocation0]]
  $region34: #{tpu_custom_call.1} parent=0
    _
  %s9 = ssub.s32 1, %s7
  %s10 = scalar_select 0, %s9, %s7
  %v11 = vstv %s5
  %12 = vst [vmem:[#allocation2] sm:$0x1] %v11
  // Predicated region
  $region2: #{tpu_custom_call.1} parent=0 // pred_check
    _
  $region3: #{tpu_custom_call.1} parent=0 // pred_check_branch
    %14 = sbr.rel (0) target = $region5
  $region4: #{tpu_custom_call.1} parent=0 // pred_region
    _
  $region5: #{tpu_custom_call.1} parent=0 // pred_fallthru
    _
  // Predicated region
  $region6: #{tpu_custom_call.1} parent=0 // pred_check
    _
  $region7: #{tpu_custom_call.1} parent=0 // pred_check_branch
    %16 = sbr.rel (0) target = $region9
  $region8: #{tpu_custom_call.1} parent=0 // pred_region
    _
  $region9: #{tpu_custom_call.1} parent=0 // pred_fallthru
    _
  // Predicated region
  $region10: #{tpu_custom_call.1} parent=0 // pred_check
    _
  $region11: #{tpu_custom_call.1} parent=0 // pred_check_branch
    %18 = sbr.rel (0) target = $region13
  $region12: #{tpu_custom_call.1} parent=0 // pred_region
    _
  $region13: #{tpu_custom_call.1} parent=0 // pred_fallthru
    _
  // Predicated region
  $region14: #{tpu_custom_call.1} parent=0 // pred_check
    _
  $region15: #{tpu_custom_call.1} parent=0 // pred_check_branch
    %20 = sbr.rel (0) target = $region17
  $region16: #{tpu_custom_call.1} parent=0 // pred_region
    _
  $region17: #{tpu_custom_call.1} parent=0 // pred_fallthru
    _
  // Predicated region
  $region18: #{tpu_custom_call.1} parent=0 // pred_check
    _
  $region19: #{tpu_custom_call.1} parent=0 // pred_check_branch
    %22 = sbr.rel (0) target = $region21
  $region20: #{tpu_custom_call.1} parent=0 // pred_region
    _
  $region21: #{tpu_custom_call.1} parent=0 // pred_fallthru
    _
  // Predicated region
  $region22: #{tpu_custom_call.1} parent=0 // pred_check
    _
  $region23: #{tpu_custom_call.1} parent=0 // pred_check_branch
    %24 = sbr.rel (0) target = $region25
  $region24: #{tpu_custom_call.1} parent=0 // pred_region
    _
  $region25: #{tpu_custom_call.1} parent=0 // pred_fallthru
    _
  %v25 = vld [vmem:[%s1] sm:$0xff]
  %v26 = vld [vmem:[%s1 + $0x8] sm:$0xff]
  %v27 = vld [vmem:[%s1 + $0x10] sm:$0xff]
  %v28 = vld [vmem:[%s1 + $0x18] sm:$0xff]
  %v29 = vld [vmem:[%s2] sm:$0x1]
  %v30 = vld [vmem:[%s3] sm:$0x1]
  %v32 = vperm.slane %v30, 0
  %v34 = vld [vmem:[%s0] sm:$0x3]
  %36 = vset.pattern.permute.xlu0 0
  %37 = vperm.xlu0 %36, %v34
  %v38 = vpop.permute.xlu0 %37
  %v41 = vperm.slane %v29, 0
  %v43 = vmul.f32 %v38, %v41
  %v44 = vadd.f32 %v43, %v32
  %45 = vset.pattern.permute.xlu0 1
  %46 = vperm.xlu0 %45, %v34
  %v47 = vpop.permute.xlu0 %46
  %v49 = vmul.f32 %v47, %v41
  %v50 = vadd.f32 %v49, %v32
  %51 = vset.pattern.permute.xlu0 2
  %52 = vperm.xlu0 %51, %v34
  %v53 = vpop.permute.xlu0 %52
  %v55 = vmul.f32 %v53, %v41
  %v56 = vadd.f32 %v55, %v32
  %57 = vset.pattern.permute.xlu0 3
  %58 = vperm.xlu0 %57, %v34
  %v59 = vpop.permute.xlu0 %58
  %v61 = vmul.f32 %v59, %v41
  %v62 = vadd.f32 %v61, %v32
  %63 = vset.pattern.permute.xlu0 4
  %64 = vperm.xlu0 %63, %v34
  %v65 = vpop.permute.xlu0 %64
  %v67 = vmul.f32 %v65, %v41
  %v68 = vadd.f32 %v67, %v32
  %69 = vset.pattern.permute.xlu0 5
  %70 = vperm.xlu0 %69, %v34
  %v71 = vpop.permute.xlu0 %70
  %v73 = vmul.f32 %v71, %v41
  %v74 = vadd.f32 %v73, %v32
  %75 = vset.pattern.permute.xlu0 6
  %76 = vperm.xlu0 %75, %v34
  %v77 = vpop.permute.xlu0 %76
  %v79 = vmul.f32 %v77, %v41
  %v80 = vadd.f32 %v79, %v32
  %81 = vset.pattern.permute.xlu0 7
  %82 = vperm.xlu0 %81, %v34
  %v83 = vpop.permute.xlu0 %82
  %v85 = vmul.f32 %v83, %v41
  %v86 = vadd.f32 %v85, %v32
  %v87 = vlaneseq
  %v88 = vand.u32 %v87, 127
  %vm89 = vcmp.ge.s32.totalorder %v88, 64
  %vm90 = vcmp.lt.s32.totalorder %v88, 96
  %vm91 = vmand %vm89, %vm90
  %vm92 = vcmp.lt.s32.totalorder %v88, 16
  %v93 = vtanh.pop %v44
  %v94 = vmul.f32 %v93, 0.5
  %v95 = vadd.f32 %v94, 0.5
  %v96 = vsel %vm91, %v93, %v95
  %98 = vrot.lane.b32.xlu0 %v96, 64
  %v99 = vpop.permute.xlu0 %98
  %v101 = vmul.f32 %v96, %v99
  %v102 = vsel %vm92, %v101, 0.0
  %v103 = vtanh.pop %v102
  %105 = vrot.lane.b32.xlu0 %v103, 96
  %v106 = vpop.permute.xlu0 %105
  %v108 = vmul.f32 %v96, %v106
  %110 = vrot.lane.b32.xlu0 %v108, 32
  %v111 = vpop.permute.xlu0 %110
  %vm112 = vcmask 261120
  %v113 = vsel %vm112, %v111, 0
  %115 = vmatpush.msra.mxu0 0.0
  %116 = vmatpush.msra.mxu0 0.0
  %117 = vmatpush.msra.mxu0 0.0
  %118 = vmatpush.msra.mxu0 0.0
  %119 = vmatpush.msra.mxu0 0.0
  %120 = vmatpush.msra.mxu0 0.0
  %121 = vmatpush.msra.mxu0 0.0
  %122 = vmatpush.msra.mxu0 0.0
  %123 = vmatpush.msra.mxu0 0.0
  %124 = vmatpush.msra.mxu0 0.0
  %125 = vmatpush.msra.mxu0 0.0
  %126 = vmatpush.msra.mxu0 0.0
  %127 = vmatpush.msra.mxu0 %v28
  %128 = vmatpush.msra.mxu0 %v27
  %129 = vmatpush.msra.mxu0 %v26
  %130 = vmatpush.msra.mxu0 %v25
  %131 = vmatmul.f32.gmra.mxu0 %v113
  %v132 = vpop.f32.mrf.mxu0
  %v133 = vadd.f32 %v50, %v132
  %134 = vdwg.mxu0
  %v135 = vtanh.pop %v133
  %v136 = vmul.f32 %v135, 0.5
  %v137 = vadd.f32 %v136, 0.5
  %v138 = vsel %vm91, %v135, %v137
  %140 = vrot.lane.b32.xlu0 %v102, 32
  %v141 = vpop.permute.xlu0 %140
  %v143 = vmul.f32 %v138, %v141
  %145 = vrot.lane.b32.xlu0 %v138, 64
  %v146 = vpop.permute.xlu0 %145
  %v148 = vmul.f32 %v138, %v146
  %150 = vrot.lane.b32.xlu0 %v148, 32
  %v151 = vpop.permute.xlu0 %150
  %v153 = vadd.f32 %v143, %v151
  %v154 = vtanh.pop %v153
  %156 = vrot.lane.b32.xlu0 %v154, 64
  %v157 = vpop.permute.xlu0 %156
  %v159 = vmul.f32 %v138, %v157
  %161 = vrot.lane.b32.xlu0 %v159, 32
  %v162 = vpop.permute.xlu0 %161
  %v163 = vsel %vm112, %v162, 0
  %165 = vmatpush.msra.mxu0 0.0
  %166 = vmatpush.msra.mxu0 0.0
  %167 = vmatpush.msra.mxu0 0.0
  %168 = vmatpush.msra.mxu0 0.0
  %169 = vmatpush.msra.mxu0 0.0
  %170 = vmatpush.msra.mxu0 0.0
  %171 = vmatpush.msra.mxu0 0.0
  %172 = vmatpush.msra.mxu0 0.0
  %173 = vmatpush.msra.mxu0 0.0
  %174 = vmatpush.msra.mxu0 0.0
  %175 = vmatpush.msra.mxu0 0.0
  %176 = vmatpush.msra.mxu0 0.0
  %177 = vmatpush.msra.mxu0 %v28
  %178 = vmatpush.msra.mxu0 %v27
  %179 = vmatpush.msra.mxu0 %v26
  %180 = vmatpush.msra.mxu0 %v25
  %181 = vmatmul.f32.gmra.mxu0 %v163
  %v182 = vpop.f32.mrf.mxu0
  %v183 = vadd.f32 %v56, %v182
  %184 = vdwg.mxu0
  %v185 = vtanh.pop %v183
  %v186 = vmul.f32 %v185, 0.5
  %v187 = vadd.f32 %v186, 0.5
  %v188 = vsel %vm91, %v185, %v187
  %v189 = vmul.f32 %v188, %v153
  %191 = vrot.lane.b32.xlu0 %v188, 64
  %v192 = vpop.permute.xlu0 %191
  %v194 = vmul.f32 %v188, %v192
  %196 = vrot.lane.b32.xlu0 %v194, 32
  %v197 = vpop.permute.xlu0 %196
  %v199 = vadd.f32 %v189, %v197
  %v200 = vtanh.pop %v199
  %202 = vrot.lane.b32.xlu0 %v200, 64
  %v203 = vpop.permute.xlu0 %202
  %v205 = vmul.f32 %v188, %v203
  %207 = vrot.lane.b32.xlu0 %v205, 32
  %v208 = vpop.permute.xlu0 %207
  %v209 = vsel %vm112, %v208, 0
  %211 = vmatpush.msra.mxu0 0.0
  %212 = vmatpush.msra.mxu0 0.0
  %213 = vmatpush.msra.mxu0 0.0
  %214 = vmatpush.msra.mxu0 0.0
  %215 = vmatpush.msra.mxu0 0.0
  %216 = vmatpush.msra.mxu0 0.0
  %217 = vmatpush.msra.mxu0 0.0
  %218 = vmatpush.msra.mxu0 0.0
  %219 = vmatpush.msra.mxu0 0.0
  %220 = vmatpush.msra.mxu0 0.0
  %221 = vmatpush.msra.mxu0 0.0
  %222 = vmatpush.msra.mxu0 0.0
  %223 = vmatpush.msra.mxu0 %v28
  %224 = vmatpush.msra.mxu0 %v27
  %225 = vmatpush.msra.mxu0 %v26
  %226 = vmatpush.msra.mxu0 %v25
  %227 = vmatmul.f32.gmra.mxu0 %v209
  %v228 = vpop.f32.mrf.mxu0
  %v229 = vadd.f32 %v62, %v228
  %230 = vdwg.mxu0
  %v231 = vtanh.pop %v229
  %v232 = vmul.f32 %v231, 0.5
  %v233 = vadd.f32 %v232, 0.5
  %v234 = vsel %vm91, %v231, %v233
  %v235 = vmul.f32 %v234, %v199
  %237 = vrot.lane.b32.xlu0 %v234, 64
  %v238 = vpop.permute.xlu0 %237
  %v240 = vmul.f32 %v234, %v238
  %242 = vrot.lane.b32.xlu0 %v240, 32
  %v243 = vpop.permute.xlu0 %242
  %v245 = vadd.f32 %v235, %v243
  %v246 = vtanh.pop %v245
  %248 = vrot.lane.b32.xlu0 %v246, 64
  %v249 = vpop.permute.xlu0 %248
  %v251 = vmul.f32 %v234, %v249
  %253 = vrot.lane.b32.xlu0 %v251, 32
  %v254 = vpop.permute.xlu0 %253
  %v255 = vsel %vm112, %v254, 0
  %257 = vmatpush.msra.mxu0 0.0
  %258 = vmatpush.msra.mxu0 0.0
  %259 = vmatpush.msra.mxu0 0.0
  %260 = vmatpush.msra.mxu0 0.0
  %261 = vmatpush.msra.mxu0 0.0
  %262 = vmatpush.msra.mxu0 0.0
  %263 = vmatpush.msra.mxu0 0.0
  %264 = vmatpush.msra.mxu0 0.0
  %265 = vmatpush.msra.mxu0 0.0
  %266 = vmatpush.msra.mxu0 0.0
  %267 = vmatpush.msra.mxu0 0.0
  %268 = vmatpush.msra.mxu0 0.0
  %269 = vmatpush.msra.mxu0 %v28
  %270 = vmatpush.msra.mxu0 %v27
  %271 = vmatpush.msra.mxu0 %v26
  %272 = vmatpush.msra.mxu0 %v25
  %273 = vmatmul.f32.gmra.mxu0 %v255
  %v274 = vpop.f32.mrf.mxu0
  %v275 = vadd.f32 %v68, %v274
  %276 = vdwg.mxu0
  %v277 = vtanh.pop %v275
  %v278 = vmul.f32 %v277, 0.5
  %v279 = vadd.f32 %v278, 0.5
  %v280 = vsel %vm91, %v277, %v279
  %v281 = vmul.f32 %v280, %v245
  %283 = vrot.lane.b32.xlu0 %v280, 64
  %v284 = vpop.permute.xlu0 %283
  %v286 = vmul.f32 %v280, %v284
  %288 = vrot.lane.b32.xlu0 %v286, 32
  %v289 = vpop.permute.xlu0 %288
  %v291 = vadd.f32 %v281, %v289
  %v292 = vtanh.pop %v291
  %294 = vrot.lane.b32.xlu0 %v292, 64
  %v295 = vpop.permute.xlu0 %294
  %v297 = vmul.f32 %v280, %v295
  %299 = vrot.lane.b32.xlu0 %v297, 32
  %v300 = vpop.permute.xlu0 %299
  %v301 = vsel %vm112, %v300, 0
  %303 = vmatpush.msra.mxu0 0.0
  %304 = vmatpush.msra.mxu0 0.0
  %305 = vmatpush.msra.mxu0 0.0
  %306 = vmatpush.msra.mxu0 0.0
  %307 = vmatpush.msra.mxu0 0.0
  %308 = vmatpush.msra.mxu0 0.0
  %309 = vmatpush.msra.mxu0 0.0
  %310 = vmatpush.msra.mxu0 0.0
  %311 = vmatpush.msra.mxu0 0.0
  %312 = vmatpush.msra.mxu0 0.0
  %313 = vmatpush.msra.mxu0 0.0
  %314 = vmatpush.msra.mxu0 0.0
  %315 = vmatpush.msra.mxu0 %v28
  %316 = vmatpush.msra.mxu0 %v27
  %317 = vmatpush.msra.mxu0 %v26
  %318 = vmatpush.msra.mxu0 %v25
  %319 = vmatmul.f32.gmra.mxu0 %v301
  %v320 = vpop.f32.mrf.mxu0
  %v321 = vadd.f32 %v74, %v320
  %322 = vdwg.mxu0
  %v323 = vtanh.pop %v321
  %v324 = vmul.f32 %v323, 0.5
  %v325 = vadd.f32 %v324, 0.5
  %v326 = vsel %vm91, %v323, %v325
  %v327 = vmul.f32 %v326, %v291
  %329 = vrot.lane.b32.xlu0 %v326, 64
  %v330 = vpop.permute.xlu0 %329
  %v332 = vmul.f32 %v326, %v330
  %334 = vrot.lane.b32.xlu0 %v332, 32
  %v335 = vpop.permute.xlu0 %334
  %v337 = vadd.f32 %v327, %v335
  %v338 = vtanh.pop %v337
  %340 = vrot.lane.b32.xlu0 %v338, 64
  %v341 = vpop.permute.xlu0 %340
  %v343 = vmul.f32 %v326, %v341
  %345 = vrot.lane.b32.xlu0 %v343, 32
  %v346 = vpop.permute.xlu0 %345
  %v347 = vsel %vm112, %v346, 0
  %349 = vmatpush.msra.mxu0 0.0
  %350 = vmatpush.msra.mxu0 0.0
  %351 = vmatpush.msra.mxu0 0.0
  %352 = vmatpush.msra.mxu0 0.0
  %353 = vmatpush.msra.mxu0 0.0
  %354 = vmatpush.msra.mxu0 0.0
  %355 = vmatpush.msra.mxu0 0.0
  %356 = vmatpush.msra.mxu0 0.0
  %357 = vmatpush.msra.mxu0 0.0
  %358 = vmatpush.msra.mxu0 0.0
  %359 = vmatpush.msra.mxu0 0.0
  %360 = vmatpush.msra.mxu0 0.0
  %361 = vmatpush.msra.mxu0 %v28
  %362 = vmatpush.msra.mxu0 %v27
  %363 = vmatpush.msra.mxu0 %v26
  %364 = vmatpush.msra.mxu0 %v25
  %365 = vmatmul.f32.gmra.mxu0 %v347
  %v366 = vpop.f32.mrf.mxu0
  %v367 = vadd.f32 %v80, %v366
  %368 = vdwg.mxu0
  %v369 = vtanh.pop %v367
  %v370 = vmul.f32 %v369, 0.5
  %v371 = vadd.f32 %v370, 0.5
  %v372 = vsel %vm91, %v369, %v371
  %v373 = vmul.f32 %v372, %v337
  %375 = vrot.lane.b32.xlu0 %v372, 64
  %v376 = vpop.permute.xlu0 %375
  %v378 = vmul.f32 %v372, %v376
  %380 = vrot.lane.b32.xlu0 %v378, 32
  %v381 = vpop.permute.xlu0 %380
  %v383 = vadd.f32 %v373, %v381
  %v384 = vtanh.pop %v383
  %386 = vrot.lane.b32.xlu0 %v384, 64
  %v387 = vpop.permute.xlu0 %386
  %v389 = vmul.f32 %v372, %v387
  %391 = vrot.lane.b32.xlu0 %v389, 32
  %v392 = vpop.permute.xlu0 %391
  %v393 = vsel %vm112, %v392, 0
  %395 = vmatpush.msra.mxu0 0.0
  %396 = vmatpush.msra.mxu0 0.0
  %397 = vmatpush.msra.mxu0 0.0
  %398 = vmatpush.msra.mxu0 0.0
  %399 = vmatpush.msra.mxu0 0.0
  %400 = vmatpush.msra.mxu0 0.0
  %401 = vmatpush.msra.mxu0 0.0
  %402 = vmatpush.msra.mxu0 0.0
  %403 = vmatpush.msra.mxu0 0.0
  %404 = vmatpush.msra.mxu0 0.0
  %405 = vmatpush.msra.mxu0 0.0
  %406 = vmatpush.msra.mxu0 0.0
  %407 = vmatpush.msra.mxu0 %v28
  %408 = vmatpush.msra.mxu0 %v27
  %409 = vmatpush.msra.mxu0 %v26
  %410 = vmatpush.msra.mxu0 %v25
  %411 = vmatmul.f32.gmra.mxu0 %v393
  %v412 = vpop.f32.mrf.mxu0
  %v413 = vadd.f32 %v86, %v412
  %414 = vdwg.mxu0
  %v415 = vtanh.pop %v413
  %v416 = vmul.f32 %v415, 0.5
  %v417 = vadd.f32 %v416, 0.5
  %v418 = vsel %vm91, %v415, %v417
  %v419 = vmul.f32 %v418, %v383
  %421 = vrot.lane.b32.xlu0 %v418, 64
  %v422 = vpop.permute.xlu0 %421
  %v424 = vmul.f32 %v418, %v422
  %426 = vrot.lane.b32.xlu0 %v424, 32
  %v427 = vpop.permute.xlu0 %426
  %v429 = vadd.f32 %v419, %v427
  %v430 = vtanh.pop %v429
  %432 = vrot.lane.b32.xlu0 %v430, 64
  %v433 = vpop.permute.xlu0 %432
  %v435 = vmul.f32 %v418, %v433
  %437 = vrot.lane.b32.xlu0 %v435, 32
  %v438 = vpop.permute.xlu0 %437
  %v439 = vsel %vm112, %v438, 0
  %441 = vmatpush.msra.mxu0 0.0
  %442 = vmatpush.msra.mxu0 0.0
  %443 = vmatpush.msra.mxu0 0.0
  %444 = vmatpush.msra.mxu0 0.0
  %445 = vmatpush.msra.mxu0 0.0
  %446 = vmatpush.msra.mxu0 0.0
  %447 = vmatpush.msra.mxu0 0.0
  %448 = vmatpush.msra.mxu0 0.0
  %449 = vmatpush.msra.mxu0 0.0
  %450 = vmatpush.msra.mxu0 0.0
  %451 = vmatpush.msra.mxu0 0.0
  %452 = vmatpush.msra.mxu0 0.0
  %453 = vmatpush.msra.mxu0 %v28
  %454 = vmatpush.msra.mxu0 %v27
  %455 = vmatpush.msra.mxu0 %v26
  %456 = vmatpush.msra.mxu0 %v25
  %457 = vmatmul.f32.gmra.mxu0 %v439
  %v458 = vpop.f32.mrf.mxu0
  %v459 = vadd.f32 %v32, %v458
  %460 = vdwg.mxu0
  %v461 = vtanh.pop %v459
  %v462 = vmul.f32 %v461, 0.5
  %v463 = vadd.f32 %v462, 0.5
  %v464 = vsel %vm91, %v461, %v463
  %v465 = vmul.f32 %v464, %v429
  %467 = vrot.lane.b32.xlu0 %v464, 64
  %v468 = vpop.permute.xlu0 %467
  %v470 = vmul.f32 %v464, %v468
  %472 = vrot.lane.b32.xlu0 %v470, 32
  %v473 = vpop.permute.xlu0 %472
  %v475 = vadd.f32 %v465, %v473
  %v476 = vtanh.pop %v475
  %478 = vrot.lane.b32.xlu0 %v476, 64
  %v479 = vpop.permute.xlu0 %478
  %v481 = vmul.f32 %v464, %v479
  %v482 = vld [vmem:[%s4] sm:$0xff]
  %v483 = vld [vmem:[%s4 + $0x8] sm:$0xff]
  %v484 = vld [vmem:[%s4 + $0x10] sm:$0xff]
  %v485 = vld [vmem:[%s4 + $0x18] sm:$0xff]
  %v486 = vld [vmem:[#allocation2] sm:$0x1]
  %v488 = vperm.slane %v486, 0
  %491 = vrot.lane.b32.xlu0 %v481, 32
  %v492 = vpop.permute.xlu0 %491
  %v493 = vsel %vm112, %v492, 0
  %495 = vmatpush.msra.mxu0 0.0
  %496 = vmatpush.msra.mxu0 0.0
  %497 = vmatpush.msra.mxu0 0.0
  %498 = vmatpush.msra.mxu0 0.0
  %499 = vmatpush.msra.mxu0 0.0
  %500 = vmatpush.msra.mxu0 0.0
  %501 = vmatpush.msra.mxu0 0.0
  %502 = vmatpush.msra.mxu0 0.0
  %503 = vmatpush.msra.mxu0 0.0
  %504 = vmatpush.msra.mxu0 0.0
  %505 = vmatpush.msra.mxu0 0.0
  %506 = vmatpush.msra.mxu0 0.0
  %507 = vmatpush.msra.mxu0 %v485
  %508 = vmatpush.msra.mxu0 %v484
  %509 = vmatpush.msra.mxu0 %v483
  %510 = vmatpush.msra.mxu0 %v482
  %511 = vmatmul.f32.gmra.mxu0 %v493
  %v512 = vpop.f32.mrf.mxu0
  %v513 = vadd.f32 %v488, %v512
  %514 = vdwg.mxu0
  %vm515 = vcmask 1024
  %516 = vst.msk [vmem:[%s6] sm:$0x3] %vm515, %v513
  // Predicated region
  $region26: #{tpu_custom_call.1} parent=0 // pred_check
    _
  $region27: #{tpu_custom_call.1} parent=0 // pred_check_branch
    %518 = sbr.rel (0) target = $region29
  $region28: #{tpu_custom_call.1} parent=0 // pred_region
    _
  $region29: #{tpu_custom_call.1} parent=0 // pred_fallthru
    _
  // Predicated region
  $region30: #{tpu_custom_call.1} parent=0 // pred_check
    _
  $region31: #{tpu_custom_call.1} parent=0 // pred_check_branch
    %520 = sbr.rel (0) target = $region33
  $region32: #{tpu_custom_call.1} parent=0 // pred_region
    _
  $region33: #{tpu_custom_call.1} parent=0 // pred_fallthru
    _

</llo_original>
